<compile_context>
chip_gen: v6e
topology: v6e:2x2x1
jax: 0.10.0
libtpu: 0.0.40
codegen_flags: <defaults>
</compile_context>

<pallas_src>
import functools

import jax
import jax.numpy as jnp
from jax.experimental import pallas as pl
from jax.experimental.pallas import tpu as pltpu

LANE = 128  # vreg lane width -> feature dims padded to multiples of this


def _round_up(n, m):
    return ((n + m - 1) // m) * m


def _vmem_cap_bytes():
    """Generation-aware VMEM budget (85% of physical, headroom for Mosaic scratch)."""
    try:
        cap = int(pltpu.get_tpu_info().vmem_capacity_bytes)
    except Exception:
        cap = 64 << 20  # conservative: v7x physical per-TC VMEM
    return int(cap * 0.85)


# ----------------------------------------------------------------------------
# Kernel factory: one batch tile through `num_layers` fused Linear(+ReLU)
# layers. Weights/biases are VMEM-resident (constant index_map, Buffered(1)),
# activations live in vregs/VMEM scratch. All matmuls accumulate in fp32.
# ----------------------------------------------------------------------------
def _make_mlp_kernel(num_layers, apply_last_relu):
    def kernel(*refs):
        x_ref = refs[0]
        o_ref = refs[-1]
        wb_refs = refs[1:-1]

        h = x_ref[...]  # already in weight dtype -> no cast before first MXU op
        for li in range(num_layers):
            w_ref = wb_refs[2 * li]
            b_ref = wb_refs[2 * li + 1]
            lhs = h if li == 0 else h.astype(w_ref.dtype)  # no-op on the f32 path
            y = jnp.dot(lhs, w_ref[...], preferred_element_type=jnp.float32)
            y = y + b_ref[...]  # fp32 bias (1, N) broadcasts over (TB, N)
            if li < num_layers - 1 or apply_last_relu:
                y = jnp.maximum(y, 0.0)
            h = y
        o_ref[...] = h.astype(o_ref.dtype)

    return kernel


# ----------------------------------------------------------------------------
# One fused chunk of consecutive layers as a single batch-tiled pallas_call.
# ----------------------------------------------------------------------------
def _chunk_call(xp, chunk, *, apply_last_relu, out_dtype, TB, cap):
    Bp, fin_pad = xp.shape
    fout_pad = int(chunk[-1][0].shape[1])
    w_dtype = chunk[0][0].dtype
    w_item = jnp.dtype(w_dtype).itemsize
    in_item = jnp.dtype(xp.dtype).itemsize
    out_item = jnp.dtype(out_dtype).itemsize
    num_layers = len(chunk)

    grid = (pl.cdiv(Bp, TB),)  # ragged last tile handled by Pallas

    flat = []
    in_specs = [pl.BlockSpec((TB, fin_pad), lambda i: (i, 0))]
    for w, b in chunk:
        # Grid-invariant operands: single-buffer them (halves resident VMEM).
        in_specs.append(
            pl.BlockSpec(w.shape, lambda i: (0, 0), pipeline_mode=pl.Buffered(1)))
        in_specs.append(
            pl.BlockSpec(b.shape, lambda i: (0, 0), pipeline_mode=pl.Buffered(1)))
        flat += [w, b]

    wb_bytes = sum(int(w.size) * w_item + int(b.size) * 4 for w, b in chunk)
    max_feat = max(max(int(w.shape[0]), int(w.shape[1])) for w, _ in chunk)
    vmem_need = (wb_bytes                                  # resident, single-buffered
                 + 2 * TB * fin_pad * in_item              # double-buffered input tile
                 + 2 * TB * fout_pad * out_item            # double-buffered output tile
                 + 2 * TB * max_feat * 4                   # fp32 intermediate activations
                 + (8 << 20))                              # Mosaic internal scratch slack
    vmem_limit = int(min(vmem_need, cap))

    flops = 2 * Bp * sum(int(w.shape[0]) * int(w.shape[1]) for w, _ in chunk)
    bytes_accessed = int(wb_bytes + Bp * fin_pad * in_item + Bp * fout_pad * out_item)

    return pl.pallas_call(
        _make_mlp_kernel(num_layers, apply_last_relu),
        out_shape=jax.ShapeDtypeStruct((Bp, fout_pad), out_dtype),
        grid=grid,
        in_specs=in_specs,
        out_specs=pl.BlockSpec((TB, fout_pad), lambda i: (i, 0)),
        compiler_params=pltpu.CompilerParams(
            dimension_semantics=("parallel",),  # shard batch tiles across TCs (v7x)
            vmem_limit_bytes=vmem_limit,
        ),
        cost_estimate=pl.CostEstimate(
            flops=flops, transcendentals=0, bytes_accessed=bytes_accessed),
    )(xp, *flat)


# ----------------------------------------------------------------------------
# Parameter preparation: zero-pad weights [in, out] to lane-dense (x128)
# feature dims in the chosen compute dtype; biases stay fp32 (tiny, avoids
# per-layer casts). Zero padding is exact for the sliced result.
# ----------------------------------------------------------------------------
def pad_params(params, dtype=jnp.float32):
    padded = []
    for w, b in params:
        fin, fout = w.shape
        fin_p, fout_p = _round_up(fin, LANE), _round_up(fout, LANE)
        wp = jnp.zeros((fin_p, fout_p), dtype).at[:fin, :fout].set(w.astype(dtype))
        bp = jnp.zeros((1, fout_p), jnp.float32).at[:, :fout].set(b.astype(jnp.float32))
        padded.append((wp, bp))
    return padded


# ----------------------------------------------------------------------------
# Forward wrapper: batch-tiled pallas_call(s) with resident weights.
# (On v7x with very large batches, pass batch_tile=512 to amortize per-step
#  overhead further; keep 128-256 on v5e.)
# ----------------------------------------------------------------------------
@functools.partial(jax.jit, static_argnames=("outsize", "batch_tile"))
def linear_network_forward(x, padded_params, *, outsize, batch_tile=256):
    B, insize = x.shape
    w_dtype = padded_params[0][0].dtype
    w_item = jnp.dtype(w_dtype).itemsize
    sub = 8 if w_item >= 4 else 16          # sublane granule (f32 vs bf16 packing)
    in_pad = int(padded_params[0][0].shape[0])

    cap = _vmem_cap_bytes()

    # Batch tile: sublane aligned; guarantee >=2 grid tiles for moderate B so
    # the v7x megacore ("parallel") actually splits work across its 2 TCs.
    if B <= sub:
        TB = sub
    elif B <= batch_tile:
        TB = _round_up((B + 1) // 2, sub)
    else:
        TB = _round_up(batch_tile, sub)
    # Pad batch only to the sublane multiple (not to TB) - ragged last grid
    # block is masked by Pallas, so no full-tile HBM padding pass.
    Bp = _round_up(B, sub)

    # Input in weight dtype -> fed straight into the first MXU matmul.
    xp = jnp.zeros((Bp, in_pad), w_dtype).at[:B, :insize].set(x.astype(w_dtype))

    # Greedy layer chunking so each chunk's (single-buffered) resident weights
    # fit comfortably in the VMEM budget; normally a single chunk of 6 layers.
    budget = int(cap * 0.7)
    chunks, cur, cur_bytes = [], [], 0
    for w, b in padded_params:
        layer_bytes = int(w.size) * w_item + int(b.size) * 4
        if cur and cur_bytes + layer_bytes > budget:
            chunks.append(cur)
            cur, cur_bytes = [], 0
        cur.append((w, b))
        cur_bytes += layer_bytes
    chunks.append(cur)

    h = xp
    for ci, chunk in enumerate(chunks):
        last = (ci == len(chunks) - 1)
        h = _chunk_call(
            h, chunk,
            apply_last_relu=not last,       # ReLU on every layer except the very last
            out_dtype=w_dtype,              # bf16 writeback on the bf16 path
            TB=TB, cap=cap)

    # Slice padded output back to the logical shape; return fp32 like the
    # PyTorch forward.
    return h[:B, :outsize].astype(jnp.float32)


# ----------------------------------------------------------------------------
# Init + pure-JAX reference (nn.Linear: y = x @ W^T + b; stored as W[in, out]).
# ----------------------------------------------------------------------------
def init_params(key, insize, hidden_size, outsize):
    dims = [insize] + [hidden_size] * 5 + [outsize]
    params = []
    for i in range(6):
        fan_in, fan_out = dims[i], dims[i + 1]
        key, kw, kb = jax.random.split(key, 3)
        bound = 1.0 / jnp.sqrt(jnp.float32(fan_in))
        w = jax.random.uniform(kw, (fan_in, fan_out), jnp.float32, -bound, bound)
        b = jax.random.uniform(kb, (1, fan_out), jnp.float32, -bound, bound)
        params.append((w, b))
    return params


def reference_forward(x, params):
    h = x
    for i, (w, b) in enumerate(params):
        h = h @ w + b
        if i < len(params) - 1:
            h = jnp.maximum(h, 0.0)
    return h


if __name__ == "__main__":
    insize, hidden_size, outsize = 16, 32, 4

    key = jax.random.PRNGKey(0)
    kx, kp, kx2 = jax.random.split(key, 3)
    params = init_params(kp, insize, hidden_size, outsize)

    # --- fp32 path, single tile (batch=8) ---
    x = jax.random.normal(kx, (8, insize), jnp.float32)
    ref = reference_forward(x, params)
    p_f32 = pad_params(params, jnp.float32)
    out_f32 = jax.block_until_ready(
        linear_network_forward(x, p_f32, outsize=outsize))
    assert out_f32.shape == (8, outsize)
    assert jnp.allclose(out_f32, ref, atol=1e-4, rtol=1e-4), "fp32 mismatch vs reference"

    # --- fp32 path, multiple tiles + ragged last grid block (batch=19) ---
    x2 = jax.random.normal(kx2, (19, insize), jnp.float32)
    ref2 = reference_forward(x2, params)
    out2 = jax.block_until_ready(
        linear_network_forward(x2, p_f32, outsize=outsize))
    assert out2.shape == (19, outsize)
    assert jnp.allclose(out2, ref2, atol=1e-4, rtol=1e-4), "fp32 multi-tile mismatch"

    # --- bf16 weights/activations with fp32 accumulation (v6e/v7x fast path) ---
    p_bf16 = pad_params(params, jnp.bfloat16)
    out_bf16 = jax.block_until_ready(
        linear_network_forward(x, p_bf16, outsize=outsize))
    assert out_bf16.shape == (8, outsize)
    assert jnp.allclose(out_bf16, ref, atol=5e-2, rtol=5e-2), "bf16 mismatch vs reference"

    print("KERNEL_OK")
</pallas_src>

<mosaic_0001>
module attributes {stable_mosaic.version = 11 : i64} {
  func.func @kernel(%arg0: i32, %arg1: memref<8x128xf32, #tpu.memory_space<vmem>>, %arg2: memref<128x128xf32, #tpu.memory_space<vmem>>, %arg3: memref<1x128xf32, #tpu.memory_space<vmem>>, %arg4: memref<128x128xf32, #tpu.memory_space<vmem>>, %arg5: memref<1x128xf32, #tpu.memory_space<vmem>>, %arg6: memref<128x128xf32, #tpu.memory_space<vmem>>, %arg7: memref<1x128xf32, #tpu.memory_space<vmem>>, %arg8: memref<128x128xf32, #tpu.memory_space<vmem>>, %arg9: memref<1x128xf32, #tpu.memory_space<vmem>>, %arg10: memref<128x128xf32, #tpu.memory_space<vmem>>, %arg11: memref<1x128xf32, #tpu.memory_space<vmem>>, %arg12: memref<128x128xf32, #tpu.memory_space<vmem>>, %arg13: memref<1x128xf32, #tpu.memory_space<vmem>>, %arg14: memref<8x128xf32, #tpu.memory_space<vmem>>) attributes {dimension_semantics = [#tpu.dimension_semantics<parallel>], iteration_bounds = array<i64: 1>, scalar_prefetch = 0 : i64, scratch_operands = 0 : i64, tpu.core_type = #tpu.core_type<tc>, window_params = [{transform_indices = @transform_0, window_bounds = array<i64: 8, 128>}, {pipeline_mode = #tpu.pipeline_mode<synchronous>, transform_indices = @transform_1, window_bounds = array<i64: 128, 128>}, {pipeline_mode = #tpu.pipeline_mode<synchronous>, transform_indices = @transform_2, window_bounds = array<i64: 1, 128>}, {pipeline_mode = #tpu.pipeline_mode<synchronous>, transform_indices = @transform_3, window_bounds = array<i64: 128, 128>}, {pipeline_mode = #tpu.pipeline_mode<synchronous>, transform_indices = @transform_4, window_bounds = array<i64: 1, 128>}, {pipeline_mode = #tpu.pipeline_mode<synchronous>, transform_indices = @transform_5, window_bounds = array<i64: 128, 128>}, {pipeline_mode = #tpu.pipeline_mode<synchronous>, transform_indices = @transform_6, window_bounds = array<i64: 1, 128>}, {pipeline_mode = #tpu.pipeline_mode<synchronous>, transform_indices = @transform_7, window_bounds = array<i64: 128, 128>}, {pipeline_mode = #tpu.pipeline_mode<synchronous>, transform_indices = @transform_8, window_bounds = array<i64: 1, 128>}, {pipeline_mode = #tpu.pipeline_mode<synchronous>, transform_indices = @transform_9, window_bounds = array<i64: 128, 128>}, {pipeline_mode = #tpu.pipeline_mode<synchronous>, transform_indices = @transform_10, window_bounds = array<i64: 1, 128>}, {pipeline_mode = #tpu.pipeline_mode<synchronous>, transform_indices = @transform_11, window_bounds = array<i64: 128, 128>}, {pipeline_mode = #tpu.pipeline_mode<synchronous>, transform_indices = @transform_12, window_bounds = array<i64: 1, 128>}, {transform_indices = @transform_13, window_bounds = array<i64: 8, 128>}]} {
    %c0 = arith.constant 0 : index
    %c0_0 = arith.constant 0 : index
    %0 = vector.load %arg1[%c0, %c0_0] : memref<8x128xf32, #tpu.memory_space<vmem>>, vector<8x128xf32>
    %c0_1 = arith.constant 0 : index
    %c0_2 = arith.constant 0 : index
    %1 = vector.load %arg2[%c0_1, %c0_2] : memref<128x128xf32, #tpu.memory_space<vmem>>, vector<128x128xf32>
    %cst = arith.constant dense<0.000000e+00> : vector<8x128xf32>
    %2 = tpu.matmul %0, %1, %cst {dimension_numbers = #tpu.dot_dimension_numbers<[1], [0], [0], [1], [0, 0, 1, 1], [], []>} : vector<8x128xf32>, vector<128x128xf32>, vector<8x128xf32> -> vector<8x128xf32>
    %c0_3 = arith.constant 0 : index
    %c0_4 = arith.constant 0 : index
    %3 = vector.load %arg3[%c0_3, %c0_4] : memref<1x128xf32, #tpu.memory_space<vmem>>, vector<1x128xf32>
    %4 = vector.broadcast %3 : vector<1x128xf32> to vector<8x128xf32>
    %5 = arith.addf %2, %4 : vector<8x128xf32>
    %cst_5 = arith.constant 0.000000e+00 : f32
    %6 = vector.broadcast %cst_5 : f32 to vector<8x128xf32>
    %7 = arith.maximumf %5, %6 : vector<8x128xf32>
    %c0_6 = arith.constant 0 : index
    %c0_7 = arith.constant 0 : index
    %8 = vector.load %arg4[%c0_6, %c0_7] : memref<128x128xf32, #tpu.memory_space<vmem>>, vector<128x128xf32>
    %cst_8 = arith.constant dense<0.000000e+00> : vector<8x128xf32>
    %9 = tpu.matmul %7, %8, %cst_8 {dimension_numbers = #tpu.dot_dimension_numbers<[1], [0], [0], [1], [0, 0, 1, 1], [], []>} : vector<8x128xf32>, vector<128x128xf32>, vector<8x128xf32> -> vector<8x128xf32>
    %c0_9 = arith.constant 0 : index
    %c0_10 = arith.constant 0 : index
    %10 = vector.load %arg5[%c0_9, %c0_10] : memref<1x128xf32, #tpu.memory_space<vmem>>, vector<1x128xf32>
    %11 = vector.broadcast %10 : vector<1x128xf32> to vector<8x128xf32>
    %12 = arith.addf %9, %11 : vector<8x128xf32>
    %cst_11 = arith.constant 0.000000e+00 : f32
    %13 = vector.broadcast %cst_11 : f32 to vector<8x128xf32>
    %14 = arith.maximumf %12, %13 : vector<8x128xf32>
    %c0_12 = arith.constant 0 : index
    %c0_13 = arith.constant 0 : index
    %15 = vector.load %arg6[%c0_12, %c0_13] : memref<128x128xf32, #tpu.memory_space<vmem>>, vector<128x128xf32>
    %cst_14 = arith.constant dense<0.000000e+00> : vector<8x128xf32>
    %16 = tpu.matmul %14, %15, %cst_14 {dimension_numbers = #tpu.dot_dimension_numbers<[1], [0], [0], [1], [0, 0, 1, 1], [], []>} : vector<8x128xf32>, vector<128x128xf32>, vector<8x128xf32> -> vector<8x128xf32>
    %c0_15 = arith.constant 0 : index
    %c0_16 = arith.constant 0 : index
    %17 = vector.load %arg7[%c0_15, %c0_16] : memref<1x128xf32, #tpu.memory_space<vmem>>, vector<1x128xf32>
    %18 = vector.broadcast %17 : vector<1x128xf32> to vector<8x128xf32>
    %19 = arith.addf %16, %18 : vector<8x128xf32>
    %cst_17 = arith.constant 0.000000e+00 : f32
    %20 = vector.broadcast %cst_17 : f32 to vector<8x128xf32>
    %21 = arith.maximumf %19, %20 : vector<8x128xf32>
    %c0_18 = arith.constant 0 : index
    %c0_19 = arith.constant 0 : index
    %22 = vector.load %arg8[%c0_18, %c0_19] : memref<128x128xf32, #tpu.memory_space<vmem>>, vector<128x128xf32>
    %cst_20 = arith.constant dense<0.000000e+00> : vector<8x128xf32>
    %23 = tpu.matmul %21, %22, %cst_20 {dimension_numbers = #tpu.dot_dimension_numbers<[1], [0], [0], [1], [0, 0, 1, 1], [], []>} : vector<8x128xf32>, vector<128x128xf32>, vector<8x128xf32> -> vector<8x128xf32>
    %c0_21 = arith.constant 0 : index
    %c0_22 = arith.constant 0 : index
    %24 = vector.load %arg9[%c0_21, %c0_22] : memref<1x128xf32, #tpu.memory_space<vmem>>, vector<1x128xf32>
    %25 = vector.broadcast %24 : vector<1x128xf32> to vector<8x128xf32>
    %26 = arith.addf %23, %25 : vector<8x128xf32>
    %cst_23 = arith.constant 0.000000e+00 : f32
    %27 = vector.broadcast %cst_23 : f32 to vector<8x128xf32>
    %28 = arith.maximumf %26, %27 : vector<8x128xf32>
    %c0_24 = arith.constant 0 : index
    %c0_25 = arith.constant 0 : index
    %29 = vector.load %arg10[%c0_24, %c0_25] : memref<128x128xf32, #tpu.memory_space<vmem>>, vector<128x128xf32>
    %cst_26 = arith.constant dense<0.000000e+00> : vector<8x128xf32>
    %30 = tpu.matmul %28, %29, %cst_26 {dimension_numbers = #tpu.dot_dimension_numbers<[1], [0], [0], [1], [0, 0, 1, 1], [], []>} : vector<8x128xf32>, vector<128x128xf32>, vector<8x128xf32> -> vector<8x128xf32>
    %c0_27 = arith.constant 0 : index
    %c0_28 = arith.constant 0 : index
    %31 = vector.load %arg11[%c0_27, %c0_28] : memref<1x128xf32, #tpu.memory_space<vmem>>, vector<1x128xf32>
    %32 = vector.broadcast %31 : vector<1x128xf32> to vector<8x128xf32>
    %33 = arith.addf %30, %32 : vector<8x128xf32>
    %cst_29 = arith.constant 0.000000e+00 : f32
    %34 = vector.broadcast %cst_29 : f32 to vector<8x128xf32>
    %35 = arith.maximumf %33, %34 : vector<8x128xf32>
    %c0_30 = arith.constant 0 : index
    %c0_31 = arith.constant 0 : index
    %36 = vector.load %arg12[%c0_30, %c0_31] : memref<128x128xf32, #tpu.memory_space<vmem>>, vector<128x128xf32>
    %cst_32 = arith.constant dense<0.000000e+00> : vector<8x128xf32>
    %37 = tpu.matmul %35, %36, %cst_32 {dimension_numbers = #tpu.dot_dimension_numbers<[1], [0], [0], [1], [0, 0, 1, 1], [], []>} : vector<8x128xf32>, vector<128x128xf32>, vector<8x128xf32> -> vector<8x128xf32>
    %c0_33 = arith.constant 0 : index
    %c0_34 = arith.constant 0 : index
    %38 = vector.load %arg13[%c0_33, %c0_34] : memref<1x128xf32, #tpu.memory_space<vmem>>, vector<1x128xf32>
    %39 = vector.broadcast %38 : vector<1x128xf32> to vector<8x128xf32>
    %40 = arith.addf %37, %39 : vector<8x128xf32>
    %c0_35 = arith.constant 0 : index
    %c0_36 = arith.constant 0 : index
    %41 = vector.load %arg14[%c0_35, %c0_36] : memref<8x128xf32, #tpu.memory_space<vmem>>, vector<8x128xf32>
    tpu.vector_store %arg14[%c0_35, %c0_36], %40 {strides = array<i32>} : memref<8x128xf32, #tpu.memory_space<vmem>>, vector<8x128xf32>,
    return
  }
  func.func @transform_0(%arg0: i32) -> (i32, i32) {
    %c0_i32 = arith.constant 0 : i32
    %c0_i32_0 = arith.constant 0 : i32
    return %arg0, %c0_i32 : i32, i32
  }
  func.func @transform_1(%arg0: i32) -> (i32, i32) {
    %c0_i32 = arith.constant 0 : i32
    %c0_i32_0 = arith.constant 0 : i32
    %c0_i32_1 = arith.constant 0 : i32
    return %c0_i32, %c0_i32_0 : i32, i32
  }
  func.func @transform_2(%arg0: i32) -> (i32, i32) {
    %c0_i32 = arith.constant 0 : i32
    %c0_i32_0 = arith.constant 0 : i32
    %c0_i32_1 = arith.constant 0 : i32
    return %c0_i32, %c0_i32_0 : i32, i32
  }
  func.func @transform_3(%arg0: i32) -> (i32, i32) {
    %c0_i32 = arith.constant 0 : i32
    %c0_i32_0 = arith.constant 0 : i32
    %c0_i32_1 = arith.constant 0 : i32
    return %c0_i32, %c0_i32_0 : i32, i32
  }
  func.func @transform_4(%arg0: i32) -> (i32, i32) {
    %c0_i32 = arith.constant 0 : i32
    %c0_i32_0 = arith.constant 0 : i32
    %c0_i32_1 = arith.constant 0 : i32
    return %c0_i32, %c0_i32_0 : i32, i32
  }
  func.func @transform_5(%arg0: i32) -> (i32, i32) {
    %c0_i32 = arith.constant 0 : i32
    %c0_i32_0 = arith.constant 0 : i32
    %c0_i32_1 = arith.constant 0 : i32
    return %c0_i32, %c0_i32_0 : i32, i32
  }
  func.func @transform_6(%arg0: i32) -> (i32, i32) {
    %c0_i32 = arith.constant 0 : i32
    %c0_i32_0 = arith.constant 0 : i32
    %c0_i32_1 = arith.constant 0 : i32
    return %c0_i32, %c0_i32_0 : i32, i32
  }
  func.func @transform_7(%arg0: i32) -> (i32, i32) {
    %c0_i32 = arith.constant 0 : i32
    %c0_i32_0 = arith.constant 0 : i32
    %c0_i32_1 = arith.constant 0 : i32
    return %c0_i32, %c0_i32_0 : i32, i32
  }
  func.func @transform_8(%arg0: i32) -> (i32, i32) {
    %c0_i32 = arith.constant 0 : i32
    %c0_i32_0 = arith.constant 0 : i32
    %c0_i32_1 = arith.constant 0 : i32
    return %c0_i32, %c0_i32_0 : i32, i32
  }
  func.func @transform_9(%arg0: i32) -> (i32, i32) {
    %c0_i32 = arith.constant 0 : i32
    %c0_i32_0 = arith.constant 0 : i32
    %c0_i32_1 = arith.constant 0 : i32
    return %c0_i32, %c0_i32_0 : i32, i32
  }
  func.func @transform_10(%arg0: i32) -> (i32, i32) {
    %c0_i32 = arith.constant 0 : i32
    %c0_i32_0 = arith.constant 0 : i32
    %c0_i32_1 = arith.constant 0 : i32
    return %c0_i32, %c0_i32_0 : i32, i32
  }
  func.func @transform_11(%arg0: i32) -> (i32, i32) {
    %c0_i32 = arith.constant 0 : i32
    %c0_i32_0 = arith.constant 0 : i32
    %c0_i32_1 = arith.constant 0 : i32
    return %c0_i32, %c0_i32_0 : i32, i32
  }
  func.func @transform_12(%arg0: i32) -> (i32, i32) {
    %c0_i32 = arith.constant 0 : i32
    %c0_i32_0 = arith.constant 0 : i32
    %c0_i32_1 = arith.constant 0 : i32
    return %c0_i32, %c0_i32_0 : i32, i32
  }
  func.func @transform_13(%arg0: i32) -> (i32, i32) {
    %c0_i32 = arith.constant 0 : i32
    %c0_i32_0 = arith.constant 0 : i32
    return %arg0, %c0_i32 : i32, i32
  }
}

</mosaic_0001>

<llo_original>
// kernel: linear_network_forward.1
$region0: #{linear_network_forward.1}
  #allocation0 [shape = 'u32[]', space=smem, size = 0x4, offset = 0x4, fixed_abs, tag = 'smem constant byte address 0x4 - core index']
  #allocation1 [shape = 'u32[144,128]{1,0:T(1,128)}', space=vmem, size = 0x12000, scoped, tag = 'internal scratch']
  %s0 = inlined_call_operand.vmem [shape: f32[8,128], index: 0, kind: input, shape index: {}]
  %s1 = inlined_call_operand.hbm [shape: f32[128,128], index: 1, kind: input, shape index: {}]
  %s2 = inlined_call_operand.vmem [shape: f32[1,128], index: 2, kind: input, shape index: {}]
  %s3 = inlined_call_operand.hbm [shape: f32[128,128], index: 3, kind: input, shape index: {}]
  %s4 = inlined_call_operand.vmem [shape: f32[1,128], index: 4, kind: input, shape index: {}]
  %s5 = inlined_call_operand.hbm [shape: f32[128,128], index: 5, kind: input, shape index: {}]
  %s6 = inlined_call_operand.vmem [shape: f32[1,128], index: 6, kind: input, shape index: {}]
  %s7 = inlined_call_operand.hbm [shape: f32[128,128], index: 7, kind: input, shape index: {}]
  %s8 = inlined_call_operand.vmem [shape: f32[1,128], index: 8, kind: input, shape index: {}]
  %s9 = inlined_call_operand.hbm [shape: f32[128,128], index: 9, kind: input, shape index: {}]
  %s10 = inlined_call_operand.vmem [shape: f32[1,128], index: 10, kind: input, shape index: {}]
  %s11 = inlined_call_operand.hbm [shape: f32[128,128], index: 11, kind: input, shape index: {}]
  %s12 = inlined_call_operand.vmem [shape: f32[1,128], index: 12, kind: input, shape index: {}]
  %s13 = inlined_call_operand.vmem [shape: f32[8,128], index: 13, kind: output, shape index: {}]
  %s14 = sld [smem:[#allocation0]]
  $region86: #{linear_network_forward.1} parent=0
    _
  %s16 = ssub.s32 1, %s14
  %s17 = scalar_select 0, %s16, %s14
  $region1: #{linear_network_forward.1} parent=0
    #allocation2 [shape = 'u8[65536]{0}', space=vmem, size = 0x10000, scoped, tag = 'input window, operand 1, single buffered']
    #allocation3 [shape = 's32[1]{0}', space=sflag, size = 0x4, scoped, tag = 'scoped memory for linear_network_forward.1']
    #allocation4 [shape = 'u8[65536]{0}', space=vmem, size = 0x10000, scoped, tag = 'input window, operand 3, single buffered']
    #allocation5 [shape = 's32[1]{0}', space=sflag, size = 0x4, scoped, tag = 'scoped memory for linear_network_forward.1']
    #allocation6 [shape = 'u8[65536]{0}', space=vmem, size = 0x10000, scoped, tag = 'input window, operand 5, single buffered']
    #allocation7 [shape = 'u8[65536]{0}', space=vmem, size = 0x10000, scoped, tag = 'input window, operand 7, single buffered']
    #allocation8 [shape = 's32[1]{0}', space=sflag, size = 0x4, scoped, tag = 'scoped memory for linear_network_forward.1']
    #allocation9 [shape = 'u8[65536]{0}', space=vmem, size = 0x10000, scoped, tag = 'input window, operand 9, single buffered']
    #allocation10 [shape = 'u8[65536]{0}', space=vmem, size = 0x10000, scoped, tag = 'input window, operand 11, single buffered']
    #allocation11 [shape = 's32[1]{0}', space=sflag, size = 0x4, scoped, tag = 'scoped memory for linear_network_forward.1']
    %18 = vsyncpa [#allocation3], 0
    %19 = vsyncpa [#allocation5], 0
    %20 = vsyncpa [#allocation8], 0
    %21 = vsyncpa [#allocation11], 0
    // Predicated region
    $region2: #{linear_network_forward.1} parent=1 // pred_check
      _
    $region3: #{linear_network_forward.1} parent=1 // pred_check_branch
      %23 = sbr.rel (0) target = $region5
    $region4: #{linear_network_forward.1} parent=1 // pred_region
      _
    $region5: #{linear_network_forward.1} parent=1 // pred_fallthru
      _
    // Predicated region
    $region6: #{linear_network_forward.1} parent=1 // pred_check
      _
    $region7: #{linear_network_forward.1} parent=1 // pred_check_branch
      %25 = sbr.rel (0) target = $region9
    $region8: #{linear_network_forward.1} parent=1 // pred_region
      %s27 = ssub.s32 2048, 2048
      %28 = vsyncadd [#allocation3], %s27
      %s29 = sshll.u32 [#allocation2], 4
      %s30 = int_to_ptr.vmem [resolvable:$true] %s29
      %35 = dma.hbm_to_vmem [thread:$0]  %s1, 2048, %s30, [#allocation3], 128, 128, 8
    $region9: #{linear_network_forward.1} parent=1 // pred_fallthru
      _
    // Predicated region
    $region10: #{linear_network_forward.1} parent=1 // pred_check
      _
    $region11: #{linear_network_forward.1} parent=1 // pred_check_branch
      %37 = sbr.rel (0) target = $region13
    $region12: #{linear_network_forward.1} parent=1 // pred_region
      _
    $region13: #{linear_network_forward.1} parent=1 // pred_fallthru
      _
    // Predicated region
    $region14: #{linear_network_forward.1} parent=1 // pred_check
      _
    $region15: #{linear_network_forward.1} parent=1 // pred_check_branch
      %39 = sbr.rel (0) target = $region17
    $region16: #{linear_network_forward.1} parent=1 // pred_region
      %s41 = ssub.s32 2048, 2048
      %42 = vsyncadd [#allocation5], %s41
      %s43 = sshll.u32 [#allocation4], 4
      %s44 = int_to_ptr.vmem [resolvable:$true] %s43
      %49 = dma.hbm_to_vmem [thread:$0]  %s3, 2048, %s44, [#allocation5], 128, 128, 8
    $region17: #{linear_network_forward.1} parent=1 // pred_fallthru
      _
    // Predicated region
    $region18: #{linear_network_forward.1} parent=1 // pred_check
      _
    $region19: #{linear_network_forward.1} parent=1 // pred_check_branch
      %51 = sbr.rel (0) target = $region21
    $region20: #{linear_network_forward.1} parent=1 // pred_region
      _
    $region21: #{linear_network_forward.1} parent=1 // pred_fallthru
      _
    // Predicated region
    $region22: #{linear_network_forward.1} parent=1 // pred_check
      _
    $region23: #{linear_network_forward.1} parent=1 // pred_check_branch
      %53 = sbr.rel (0) target = $region25
    $region24: #{linear_network_forward.1} parent=1 // pred_region
      %s55 = ssub.s32 2048, 2048
      %56 = vsyncadd [#allocation5], %s55
      %s57 = sshll.u32 [#allocation6], 4
      %s58 = int_to_ptr.vmem [resolvable:$true] %s57
      %63 = dma.hbm_to_vmem [thread:$0]  %s5, 2048, %s58, [#allocation5], 128, 128, 8
    $region25: #{linear_network_forward.1} parent=1 // pred_fallthru
      _
    // Predicated region
    $region26: #{linear_network_forward.1} parent=1 // pred_check
      _
    $region27: #{linear_network_forward.1} parent=1 // pred_check_branch
      %65 = sbr.rel (0) target = $region29
    $region28: #{linear_network_forward.1} parent=1 // pred_region
      _
    $region29: #{linear_network_forward.1} parent=1 // pred_fallthru
      _
    // Predicated region
    $region30: #{linear_network_forward.1} parent=1 // pred_check
      _
    $region31: #{linear_network_forward.1} parent=1 // pred_check_branch
      %67 = sbr.rel (0) target = $region33
    $region32: #{linear_network_forward.1} parent=1 // pred_region
      %s69 = ssub.s32 2048, 2048
      %70 = vsyncadd [#allocation8], %s69
      %s71 = sshll.u32 [#allocation7], 4
      %s72 = int_to_ptr.vmem [resolvable:$true] %s71
      %77 = dma.hbm_to_vmem [thread:$0]  %s7, 2048, %s72, [#allocation8], 128, 128, 8
    $region33: #{linear_network_forward.1} parent=1 // pred_fallthru
      _
    // Predicated region
    $region34: #{linear_network_forward.1} parent=1 // pred_check
      _
    $region35: #{linear_network_forward.1} parent=1 // pred_check_branch
      %79 = sbr.rel (0) target = $region37
    $region36: #{linear_network_forward.1} parent=1 // pred_region
      _
    $region37: #{linear_network_forward.1} parent=1 // pred_fallthru
      _
    // Predicated region
    $region38: #{linear_network_forward.1} parent=1 // pred_check
      _
    $region39: #{linear_network_forward.1} parent=1 // pred_check_branch
      %81 = sbr.rel (0) target = $region41
    $region40: #{linear_network_forward.1} parent=1 // pred_region
      %s83 = ssub.s32 2048, 2048
      %84 = vsyncadd [#allocation8], %s83
      %s85 = sshll.u32 [#allocation9], 4
      %s86 = int_to_ptr.vmem [resolvable:$true] %s85
      %91 = dma.hbm_to_vmem [thread:$0]  %s9, 2048, %s86, [#allocation8], 128, 128, 8
    $region41: #{linear_network_forward.1} parent=1 // pred_fallthru
      _
    // Predicated region
    $region42: #{linear_network_forward.1} parent=1 // pred_check
      _
    $region43: #{linear_network_forward.1} parent=1 // pred_check_branch
      %93 = sbr.rel (0) target = $region45
    $region44: #{linear_network_forward.1} parent=1 // pred_region
      _
    $region45: #{linear_network_forward.1} parent=1 // pred_fallthru
      _
    // Predicated region
    $region46: #{linear_network_forward.1} parent=1 // pred_check
      _
    $region47: #{linear_network_forward.1} parent=1 // pred_check_branch
      %95 = sbr.rel (0) target = $region49
    $region48: #{linear_network_forward.1} parent=1 // pred_region
      %s97 = ssub.s32 2048, 2048
      %98 = vsyncadd [#allocation11], %s97
      %s99 = sshll.u32 [#allocation10], 4
      %s100 = int_to_ptr.vmem [resolvable:$true] %s99
      %105 = dma.hbm_to_vmem [thread:$0]  %s11, 2048, %s100, [#allocation11], 128, 128, 8
    $region49: #{linear_network_forward.1} parent=1 // pred_fallthru
      _
    // Predicated region
    $region50: #{linear_network_forward.1} parent=1 // pred_check
      _
    $region51: #{linear_network_forward.1} parent=1 // pred_check_branch
      %107 = sbr.rel (0) target = $region53
    $region52: #{linear_network_forward.1} parent=1 // pred_region
      _
    $region53: #{linear_network_forward.1} parent=1 // pred_fallthru
      _
    // Predicated region
    $region54: #{linear_network_forward.1} parent=1 // pred_check
      _
    $region55: #{linear_network_forward.1} parent=1 // pred_check_branch
      %109 = sbr.rel (0) target = $region57
    $region56: #{linear_network_forward.1} parent=1 // pred_region
      %110 = dma.done [#allocation3], 2048
    $region57: #{linear_network_forward.1} parent=1 // pred_fallthru
      _
    // Predicated region
    $region58: #{linear_network_forward.1} parent=1 // pred_check
      _
    $region59: #{linear_network_forward.1} parent=1 // pred_check_branch
      %112 = sbr.rel (0) target = $region61
    $region60: #{linear_network_forward.1} parent=1 // pred_region
      %113 = dma.done [#allocation5], 2048
    $region61: #{linear_network_forward.1} parent=1 // pred_fallthru
      _
    // Predicated region
    $region62: #{linear_network_forward.1} parent=1 // pred_check
      _
    $region63: #{linear_network_forward.1} parent=1 // pred_check_branch
      %115 = sbr.rel (0) target = $region65
    $region64: #{linear_network_forward.1} parent=1 // pred_region
      %116 = dma.done [#allocation5], 2048
    $region65: #{linear_network_forward.1} parent=1 // pred_fallthru
      _
    // Predicated region
    $region66: #{linear_network_forward.1} parent=1 // pred_check
      _
    $region67: #{linear_network_forward.1} parent=1 // pred_check_branch
      %118 = sbr.rel (0) target = $region69
    $region68: #{linear_network_forward.1} parent=1 // pred_region
      %119 = dma.done [#allocation8], 2048
    $region69: #{linear_network_forward.1} parent=1 // pred_fallthru
      _
    // Predicated region
    $region70: #{linear_network_forward.1} parent=1 // pred_check
      _
    $region71: #{linear_network_forward.1} parent=1 // pred_check_branch
      %121 = sbr.rel (0) target = $region73
    $region72: #{linear_network_forward.1} parent=1 // pred_region
      %122 = dma.done [#allocation8], 2048
    $region73: #{linear_network_forward.1} parent=1 // pred_fallthru
      _
    // Predicated region
    $region74: #{linear_network_forward.1} parent=1 // pred_check
      _
    $region75: #{linear_network_forward.1} parent=1 // pred_check_branch
      %124 = sbr.rel (0) target = $region77
    $region76: #{linear_network_forward.1} parent=1 // pred_region
      %125 = dma.done [#allocation11], 2048
    $region77: #{linear_network_forward.1} parent=1 // pred_fallthru
      _
    %v126 = vld [vmem:[%s0] sm:$0xff]
    %v127 = vld [vmem:[#allocation2] sm:$0xff]
    %v128 = vld [vmem:[#allocation2 + $0x8] sm:$0xff]
    %v129 = vld [vmem:[#allocation2 + $0x10] sm:$0xff]
    %v130 = vld [vmem:[#allocation2 + $0x18] sm:$0xff]
    %v131 = vld [vmem:[#allocation2 + $0x20] sm:$0xff]
    %v132 = vld [vmem:[#allocation2 + $0x28] sm:$0xff]
    %v133 = vld [vmem:[#allocation2 + $0x30] sm:$0xff]
    %v134 = vld [vmem:[#allocation2 + $0x38] sm:$0xff]
    %v135 = vld [vmem:[#allocation2 + $0x40] sm:$0xff]
    %v136 = vld [vmem:[#allocation2 + $0x48] sm:$0xff]
    %v137 = vld [vmem:[#allocation2 + $0x50] sm:$0xff]
    %v138 = vld [vmem:[#allocation2 + $0x58] sm:$0xff]
    %v139 = vld [vmem:[#allocation2 + $0x60] sm:$0xff]
    %v140 = vld [vmem:[#allocation2 + $0x68] sm:$0xff]
    %v141 = vld [vmem:[#allocation2 + $0x70] sm:$0xff]
    %v142 = vld [vmem:[#allocation2 + $0x78] sm:$0xff]
    %v143 = vld [vmem:[%s2] sm:$0x1]
    %v145 = vlaneseq
    %v146 = vshrl.u32 %v145, 7
    %v147 = vsub.s32 0, %v146
    %v148 = vrot.slane %v143, %v147
    %150 = vmatprep.subr.mxu0 0.0
    %151 = vmatpush1.msra.mxu0 %v142
    %152 = vmatprep.subr.mxu0 0.0
    %153 = vmatpush1.msra.mxu0 %v141
    %154 = vmatprep.subr.mxu0 0.0
    %155 = vmatpush1.msra.mxu0 %v140
    %156 = vmatprep.subr.mxu0 0.0
    %157 = vmatpush1.msra.mxu0 %v139
    %158 = vmatprep.subr.mxu0 0.0
    %159 = vmatpush1.msra.mxu0 %v138
    %160 = vmatprep.subr.mxu0 0.0
    %161 = vmatpush1.msra.mxu0 %v137
    %162 = vmatprep.subr.mxu0 0.0
    %163 = vmatpush1.msra.mxu0 %v136
    %164 = vmatprep.subr.mxu0 0.0
    %165 = vmatpush1.msra.mxu0 %v135
    %166 = vmatprep.subr.mxu0 0.0
    %167 = vmatpush1.msra.mxu0 %v134
    %168 = vmatprep.subr.mxu0 0.0
    %169 = vmatpush1.msra.mxu0 %v133
    %170 = vmatprep.subr.mxu0 0.0
    %171 = vmatpush1.msra.mxu0 %v132
    %172 = vmatprep.subr.mxu0 0.0
    %173 = vmatpush1.msra.mxu0 %v131
    %174 = vmatprep.subr.mxu0 0.0
    %175 = vmatpush1.msra.mxu0 %v130
    %176 = vmatprep.subr.mxu0 0.0
    %177 = vmatpush1.msra.mxu0 %v129
    %178 = vmatprep.subr.mxu0 0.0
    %179 = vmatpush1.msra.mxu0 %v128
    %180 = vmatprep.subr.mxu0 0.0
    %181 = vmatpush1.msra.mxu0 %v127
    %182 = vmatprep.subr.mxu0 0.0
    %183 = vmatpush2.msra.mxu0 0.0
    %184 = vmatprep.subr.mxu0 0.0
    %185 = vmatpush2.msra.mxu0 0.0
    %186 = vmatprep.subr.mxu0 0.0
    %187 = vmatpush2.msra.mxu0 0.0
    %188 = vmatprep.subr.mxu0 0.0
    %189 = vmatpush2.msra.mxu0 0.0
    %190 = vmatprep.subr.mxu0 0.0
    %191 = vmatpush2.msra.mxu0 0.0
    %192 = vmatprep.subr.mxu0 0.0
    %193 = vmatpush2.msra.mxu0 0.0
    %194 = vmatprep.subr.mxu0 0.0
    %195 = vmatpush2.msra.mxu0 0.0
    %196 = vmatprep.subr.mxu0 0.0
    %197 = vmatpush2.msra.mxu0 0.0
    %198 = vmatprep.subr.mxu0 0.0
    %199 = vmatpush2.msra.mxu0 0.0
    %200 = vmatprep.subr.mxu0 0.0
    %201 = vmatpush2.msra.mxu0 0.0
    %202 = vmatprep.subr.mxu0 0.0
    %203 = vmatpush2.msra.mxu0 0.0
    %204 = vmatprep.subr.mxu0 0.0
    %205 = vmatpush2.msra.mxu0 0.0
    %206 = vmatprep.subr.mxu0 0.0
    %207 = vmatpush2.msra.mxu0 0.0
    %208 = vmatprep.subr.mxu0 0.0
    %209 = vmatpush2.msra.mxu0 0.0
    %210 = vmatprep.subr.mxu0 0.0
    %211 = vmatpush2.msra.mxu0 0.0
    %212 = vmatprep.subr.mxu0 0.0
    %213 = vmatpush2.msra.mxu0 0.0
    %214 = vmatprep.mubr.f32.mxu0 0.0
    %215 = vmatmul.mubr.f32.gmra.mxu0 %v126
    %v216 = vpop.f32.mrf.mxu0
    %v217 = vadd.f32 %v148, %v216
    %v218 = vpop.f32.mrf.mxu0
    %219 = vdwg.mxu0
    %v220 = vmax.f32 %v217, 0.0
    %v221 = vld [vmem:[#allocation4] sm:$0xff]
    %v222 = vld [vmem:[#allocation4 + $0x8] sm:$0xff]
    %v223 = vld [vmem:[#allocation4 + $0x10] sm:$0xff]
    %v224 = vld [vmem:[#allocation4 + $0x18] sm:$0xff]
    %v225 = vld [vmem:[#allocation4 + $0x20] sm:$0xff]
    %v226 = vld [vmem:[#allocation4 + $0x28] sm:$0xff]
    %v227 = vld [vmem:[#allocation4 + $0x30] sm:$0xff]
    %v228 = vld [vmem:[#allocation4 + $0x38] sm:$0xff]
    %v229 = vld [vmem:[#allocation4 + $0x40] sm:$0xff]
    %v230 = vld [vmem:[#allocation4 + $0x48] sm:$0xff]
    %v231 = vld [vmem:[#allocation4 + $0x50] sm:$0xff]
    %v232 = vld [vmem:[#allocation4 + $0x58] sm:$0xff]
    %v233 = vld [vmem:[#allocation4 + $0x60] sm:$0xff]
    %v234 = vld [vmem:[#allocation4 + $0x68] sm:$0xff]
    %v235 = vld [vmem:[#allocation4 + $0x70] sm:$0xff]
    %v236 = vld [vmem:[#allocation4 + $0x78] sm:$0xff]
    %v237 = vld [vmem:[%s4] sm:$0x1]
    %v239 = vlaneseq
    %v240 = vshrl.u32 %v239, 7
    %v241 = vsub.s32 0, %v240
    %v242 = vrot.slane %v237, %v241
    %244 = vmatprep.subr.mxu0 0.0
    %245 = vmatpush1.msra.mxu0 %v236
    %246 = vmatprep.subr.mxu0 0.0
    %247 = vmatpush1.msra.mxu0 %v235
    %248 = vmatprep.subr.mxu0 0.0
    %249 = vmatpush1.msra.mxu0 %v234
    %250 = vmatprep.subr.mxu0 0.0
    %251 = vmatpush1.msra.mxu0 %v233
    %252 = vmatprep.subr.mxu0 0.0
    %253 = vmatpush1.msra.mxu0 %v232
    %254 = vmatprep.subr.mxu0 0.0
    %255 = vmatpush1.msra.mxu0 %v231
    %256 = vmatprep.subr.mxu0 0.0
    %257 = vmatpush1.msra.mxu0 %v230
    %258 = vmatprep.subr.mxu0 0.0
    %259 = vmatpush1.msra.mxu0 %v229
    %260 = vmatprep.subr.mxu0 0.0
    %261 = vmatpush1.msra.mxu0 %v228
    %262 = vmatprep.subr.mxu0 0.0
    %263 = vmatpush1.msra.mxu0 %v227
    %264 = vmatprep.subr.mxu0 0.0
    %265 = vmatpush1.msra.mxu0 %v226
    %266 = vmatprep.subr.mxu0 0.0
    %267 = vmatpush1.msra.mxu0 %v225
    %268 = vmatprep.subr.mxu0 0.0
    %269 = vmatpush1.msra.mxu0 %v224
    %270 = vmatprep.subr.mxu0 0.0
    %271 = vmatpush1.msra.mxu0 %v223
    %272 = vmatprep.subr.mxu0 0.0
    %273 = vmatpush1.msra.mxu0 %v222
    %274 = vmatprep.subr.mxu0 0.0
    %275 = vmatpush1.msra.mxu0 %v221
    %276 = vmatprep.subr.mxu0 0.0
    %277 = vmatpush2.msra.mxu0 0.0
    %278 = vmatprep.subr.mxu0 0.0
    %279 = vmatpush2.msra.mxu0 0.0
    %280 = vmatprep.subr.mxu0 0.0
    %281 = vmatpush2.msra.mxu0 0.0
    %282 = vmatprep.subr.mxu0 0.0
    %283 = vmatpush2.msra.mxu0 0.0
    %284 = vmatprep.subr.mxu0 0.0
    %285 = vmatpush2.msra.mxu0 0.0
    %286 = vmatprep.subr.mxu0 0.0
    %287 = vmatpush2.msra.mxu0 0.0
    %288 = vmatprep.subr.mxu0 0.0
    %289 = vmatpush2.msra.mxu0 0.0
    %290 = vmatprep.subr.mxu0 0.0
    %291 = vmatpush2.msra.mxu0 0.0
    %292 = vmatprep.subr.mxu0 0.0
    %293 = vmatpush2.msra.mxu0 0.0
    %294 = vmatprep.subr.mxu0 0.0
    %295 = vmatpush2.msra.mxu0 0.0
    %296 = vmatprep.subr.mxu0 0.0
    %297 = vmatpush2.msra.mxu0 0.0
    %298 = vmatprep.subr.mxu0 0.0
    %299 = vmatpush2.msra.mxu0 0.0
    %300 = vmatprep.subr.mxu0 0.0
    %301 = vmatpush2.msra.mxu0 0.0
    %302 = vmatprep.subr.mxu0 0.0
    %303 = vmatpush2.msra.mxu0 0.0
    %304 = vmatprep.subr.mxu0 0.0
    %305 = vmatpush2.msra.mxu0 0.0
    %306 = vmatprep.subr.mxu0 0.0
    %307 = vmatpush2.msra.mxu0 0.0
    %308 = vmatprep.mubr.f32.mxu0 0.0
    %309 = vmatmul.mubr.f32.gmra.mxu0 %v220
    %v310 = vpop.f32.mrf.mxu0
    %v311 = vadd.f32 %v242, %v310
    %v312 = vpop.f32.mrf.mxu0
    %313 = vdwg.mxu0
    %v314 = vmax.f32 %v311, 0.0
    %v315 = vld [vmem:[#allocation6] sm:$0xff]
    %v316 = vld [vmem:[#allocation6 + $0x8] sm:$0xff]
    %v317 = vld [vmem:[#allocation6 + $0x10] sm:$0xff]
    %v318 = vld [vmem:[#allocation6 + $0x18] sm:$0xff]
    %v319 = vld [vmem:[#allocation6 + $0x20] sm:$0xff]
    %v320 = vld [vmem:[#allocation6 + $0x28] sm:$0xff]
    %v321 = vld [vmem:[#allocation6 + $0x30] sm:$0xff]
    %v322 = vld [vmem:[#allocation6 + $0x38] sm:$0xff]
    %v323 = vld [vmem:[#allocation6 + $0x40] sm:$0xff]
    %v324 = vld [vmem:[#allocation6 + $0x48] sm:$0xff]
    %v325 = vld [vmem:[#allocation6 + $0x50] sm:$0xff]
    %v326 = vld [vmem:[#allocation6 + $0x58] sm:$0xff]
    %v327 = vld [vmem:[#allocation6 + $0x60] sm:$0xff]
    %v328 = vld [vmem:[#allocation6 + $0x68] sm:$0xff]
    %v329 = vld [vmem:[#allocation6 + $0x70] sm:$0xff]
    %v330 = vld [vmem:[#allocation6 + $0x78] sm:$0xff]
    %v331 = vld [vmem:[%s6] sm:$0x1]
    %v333 = vlaneseq
    %v334 = vshrl.u32 %v333, 7
    %v335 = vsub.s32 0, %v334
    %v336 = vrot.slane %v331, %v335
    %338 = vmatprep.subr.mxu0 0.0
    %339 = vmatpush1.msra.mxu0 %v330
    %340 = vmatprep.subr.mxu0 0.0
    %341 = vmatpush1.msra.mxu0 %v329
    %342 = vmatprep.subr.mxu0 0.0
    %343 = vmatpush1.msra.mxu0 %v328
    %344 = vmatprep.subr.mxu0 0.0
    %345 = vmatpush1.msra.mxu0 %v327
    %346 = vmatprep.subr.mxu0 0.0
    %347 = vmatpush1.msra.mxu0 %v326
    %348 = vmatprep.subr.mxu0 0.0
    %349 = vmatpush1.msra.mxu0 %v325
    %350 = vmatprep.subr.mxu0 0.0
    %351 = vmatpush1.msra.mxu0 %v324
    %352 = vmatprep.subr.mxu0 0.0
    %353 = vmatpush1.msra.mxu0 %v323
    %354 = vmatprep.subr.mxu0 0.0
    %355 = vmatpush1.msra.mxu0 %v322
    %356 = vmatprep.subr.mxu0 0.0
    %357 = vmatpush1.msra.mxu0 %v321
    %358 = vmatprep.subr.mxu0 0.0
    %359 = vmatpush1.msra.mxu0 %v320
    %360 = vmatprep.subr.mxu0 0.0
    %361 = vmatpush1.msra.mxu0 %v319
    %362 = vmatprep.subr.mxu0 0.0
    %363 = vmatpush1.msra.mxu0 %v318
    %364 = vmatprep.subr.mxu0 0.0
    %365 = vmatpush1.msra.mxu0 %v317
    %366 = vmatprep.subr.mxu0 0.0
    %367 = vmatpush1.msra.mxu0 %v316
    %368 = vmatprep.subr.mxu0 0.0
    %369 = vmatpush1.msra.mxu0 %v315
    %370 = vmatprep.subr.mxu0 0.0
    %371 = vmatpush2.msra.mxu0 0.0
    %372 = vmatprep.subr.mxu0 0.0
    %373 = vmatpush2.msra.mxu0 0.0
    %374 = vmatprep.subr.mxu0 0.0
    %375 = vmatpush2.msra.mxu0 0.0
    %376 = vmatprep.subr.mxu0 0.0
    %377 = vmatpush2.msra.mxu0 0.0
    %378 = vmatprep.subr.mxu0 0.0
    %379 = vmatpush2.msra.mxu0 0.0
    %380 = vmatprep.subr.mxu0 0.0
    %381 = vmatpush2.msra.mxu0 0.0
    %382 = vmatprep.subr.mxu0 0.0
    %383 = vmatpush2.msra.mxu0 0.0
    %384 = vmatprep.subr.mxu0 0.0
    %385 = vmatpush2.msra.mxu0 0.0
    %386 = vmatprep.subr.mxu0 0.0
    %387 = vmatpush2.msra.mxu0 0.0
    %388 = vmatprep.subr.mxu0 0.0
    %389 = vmatpush2.msra.mxu0 0.0
    %390 = vmatprep.subr.mxu0 0.0
    %391 = vmatpush2.msra.mxu0 0.0
    %392 = vmatprep.subr.mxu0 0.0
    %393 = vmatpush2.msra.mxu0 0.0
    %394 = vmatprep.subr.mxu0 0.0
    %395 = vmatpush2.msra.mxu0 0.0
    %396 = vmatprep.subr.mxu0 0.0
    %397 = vmatpush2.msra.mxu0 0.0
    %398 = vmatprep.subr.mxu0 0.0
    %399 = vmatpush2.msra.mxu0 0.0
    %400 = vmatprep.subr.mxu0 0.0
    %401 = vmatpush2.msra.mxu0 0.0
    %402 = vmatprep.mubr.f32.mxu0 0.0
    %403 = vmatmul.mubr.f32.gmra.mxu0 %v314
    %v404 = vpop.f32.mrf.mxu0
    %v405 = vadd.f32 %v336, %v404
    %v406 = vpop.f32.mrf.mxu0
    %407 = vdwg.mxu0
    %v408 = vmax.f32 %v405, 0.0
    %v409 = vld [vmem:[#allocation7] sm:$0xff]
    %v410 = vld [vmem:[#allocation7 + $0x8] sm:$0xff]
    %v411 = vld [vmem:[#allocation7 + $0x10] sm:$0xff]
    %v412 = vld [vmem:[#allocation7 + $0x18] sm:$0xff]
    %v413 = vld [vmem:[#allocation7 + $0x20] sm:$0xff]
    %v414 = vld [vmem:[#allocation7 + $0x28] sm:$0xff]
    %v415 = vld [vmem:[#allocation7 + $0x30] sm:$0xff]
    %v416 = vld [vmem:[#allocation7 + $0x38] sm:$0xff]
    %v417 = vld [vmem:[#allocation7 + $0x40] sm:$0xff]
    %v418 = vld [vmem:[#allocation7 + $0x48] sm:$0xff]
    %v419 = vld [vmem:[#allocation7 + $0x50] sm:$0xff]
    %v420 = vld [vmem:[#allocation7 + $0x58] sm:$0xff]
    %v421 = vld [vmem:[#allocation7 + $0x60] sm:$0xff]
    %v422 = vld [vmem:[#allocation7 + $0x68] sm:$0xff]
    %v423 = vld [vmem:[#allocation7 + $0x70] sm:$0xff]
    %v424 = vld [vmem:[#allocation7 + $0x78] sm:$0xff]
    %v425 = vld [vmem:[%s8] sm:$0x1]
    %v427 = vlaneseq
    %v428 = vshrl.u32 %v427, 7
    %v429 = vsub.s32 0, %v428
    %v430 = vrot.slane %v425, %v429
    %432 = vmatprep.subr.mxu0 0.0
    %433 = vmatpush1.msra.mxu0 %v424
    %434 = vmatprep.subr.mxu0 0.0
    %435 = vmatpush1.msra.mxu0 %v423
    %436 = vmatprep.subr.mxu0 0.0
    %437 = vmatpush1.msra.mxu0 %v422
    %438 = vmatprep.subr.mxu0 0.0
    %439 = vmatpush1.msra.mxu0 %v421
    %440 = vmatprep.subr.mxu0 0.0
    %441 = vmatpush1.msra.mxu0 %v420
    %442 = vmatprep.subr.mxu0 0.0
    %443 = vmatpush1.msra.mxu0 %v419
    %444 = vmatprep.subr.mxu0 0.0
    %445 = vmatpush1.msra.mxu0 %v418
    %446 = vmatprep.subr.mxu0 0.0
    %447 = vmatpush1.msra.mxu0 %v417
    %448 = vmatprep.subr.mxu0 0.0
    %449 = vmatpush1.msra.mxu0 %v416
    %450 = vmatprep.subr.mxu0 0.0
    %451 = vmatpush1.msra.mxu0 %v415
    %452 = vmatprep.subr.mxu0 0.0
    %453 = vmatpush1.msra.mxu0 %v414
    %454 = vmatprep.subr.mxu0 0.0
    %455 = vmatpush1.msra.mxu0 %v413
    %456 = vmatprep.subr.mxu0 0.0
    %457 = vmatpush1.msra.mxu0 %v412
    %458 = vmatprep.subr.mxu0 0.0
    %459 = vmatpush1.msra.mxu0 %v411
    %460 = vmatprep.subr.mxu0 0.0
    %461 = vmatpush1.msra.mxu0 %v410
    %462 = vmatprep.subr.mxu0 0.0
    %463 = vmatpush1.msra.mxu0 %v409
    %464 = vmatprep.subr.mxu0 0.0
    %465 = vmatpush2.msra.mxu0 0.0
    %466 = vmatprep.subr.mxu0 0.0
    %467 = vmatpush2.msra.mxu0 0.0
    %468 = vmatprep.subr.mxu0 0.0
    %469 = vmatpush2.msra.mxu0 0.0
    %470 = vmatprep.subr.mxu0 0.0
    %471 = vmatpush2.msra.mxu0 0.0
    %472 = vmatprep.subr.mxu0 0.0
    %473 = vmatpush2.msra.mxu0 0.0
    %474 = vmatprep.subr.mxu0 0.0
    %475 = vmatpush2.msra.mxu0 0.0
    %476 = vmatprep.subr.mxu0 0.0
    %477 = vmatpush2.msra.mxu0 0.0
    %478 = vmatprep.subr.mxu0 0.0
    %479 = vmatpush2.msra.mxu0 0.0
    %480 = vmatprep.subr.mxu0 0.0
    %481 = vmatpush2.msra.mxu0 0.0
    %482 = vmatprep.subr.mxu0 0.0
    %483 = vmatpush2.msra.mxu0 0.0
    %484 = vmatprep.subr.mxu0 0.0
    %485 = vmatpush2.msra.mxu0 0.0
    %486 = vmatprep.subr.mxu0 0.0
    %487 = vmatpush2.msra.mxu0 0.0
    %488 = vmatprep.subr.mxu0 0.0
    %489 = vmatpush2.msra.mxu0 0.0
    %490 = vmatprep.subr.mxu0 0.0
    %491 = vmatpush2.msra.mxu0 0.0
    %492 = vmatprep.subr.mxu0 0.0
    %493 = vmatpush2.msra.mxu0 0.0
    %494 = vmatprep.subr.mxu0 0.0
    %495 = vmatpush2.msra.mxu0 0.0
    %496 = vmatprep.mubr.f32.mxu0 0.0
    %497 = vmatmul.mubr.f32.gmra.mxu0 %v408
    %v498 = vpop.f32.mrf.mxu0
    %v499 = vadd.f32 %v430, %v498
    %v500 = vpop.f32.mrf.mxu0
    %501 = vdwg.mxu0
    %v502 = vmax.f32 %v499, 0.0
    %v503 = vld [vmem:[#allocation9] sm:$0xff]
    %v504 = vld [vmem:[#allocation9 + $0x8] sm:$0xff]
    %v505 = vld [vmem:[#allocation9 + $0x10] sm:$0xff]
    %v506 = vld [vmem:[#allocation9 + $0x18] sm:$0xff]
    %v507 = vld [vmem:[#allocation9 + $0x20] sm:$0xff]
    %v508 = vld [vmem:[#allocation9 + $0x28] sm:$0xff]
    %v509 = vld [vmem:[#allocation9 + $0x30] sm:$0xff]
    %v510 = vld [vmem:[#allocation9 + $0x38] sm:$0xff]
    %v511 = vld [vmem:[#allocation9 + $0x40] sm:$0xff]
    %v512 = vld [vmem:[#allocation9 + $0x48] sm:$0xff]
    %v513 = vld [vmem:[#allocation9 + $0x50] sm:$0xff]
    %v514 = vld [vmem:[#allocation9 + $0x58] sm:$0xff]
    %v515 = vld [vmem:[#allocation9 + $0x60] sm:$0xff]
    %v516 = vld [vmem:[#allocation9 + $0x68] sm:$0xff]
    %v517 = vld [vmem:[#allocation9 + $0x70] sm:$0xff]
    %v518 = vld [vmem:[#allocation9 + $0x78] sm:$0xff]
    %v519 = vld [vmem:[%s10] sm:$0x1]
    %v521 = vlaneseq
    %v522 = vshrl.u32 %v521, 7
    %v523 = vsub.s32 0, %v522
    %v524 = vrot.slane %v519, %v523
    %526 = vmatprep.subr.mxu0 0.0
    %527 = vmatpush1.msra.mxu0 %v518
    %528 = vmatprep.subr.mxu0 0.0
    %529 = vmatpush1.msra.mxu0 %v517
    %530 = vmatprep.subr.mxu0 0.0
    %531 = vmatpush1.msra.mxu0 %v516
    %532 = vmatprep.subr.mxu0 0.0
    %533 = vmatpush1.msra.mxu0 %v515
    %534 = vmatprep.subr.mxu0 0.0
    %535 = vmatpush1.msra.mxu0 %v514
    %536 = vmatprep.subr.mxu0 0.0
    %537 = vmatpush1.msra.mxu0 %v513
    %538 = vmatprep.subr.mxu0 0.0
    %539 = vmatpush1.msra.mxu0 %v512
    %540 = vmatprep.subr.mxu0 0.0
    %541 = vmatpush1.msra.mxu0 %v511
    %542 = vmatprep.subr.mxu0 0.0
    %543 = vmatpush1.msra.mxu0 %v510
    %544 = vmatprep.subr.mxu0 0.0
    %545 = vmatpush1.msra.mxu0 %v509
    %546 = vmatprep.subr.mxu0 0.0
    %547 = vmatpush1.msra.mxu0 %v508
    %548 = vmatprep.subr.mxu0 0.0
    %549 = vmatpush1.msra.mxu0 %v507
    %550 = vmatprep.subr.mxu0 0.0
    %551 = vmatpush1.msra.mxu0 %v506
    %552 = vmatprep.subr.mxu0 0.0
    %553 = vmatpush1.msra.mxu0 %v505
    %554 = vmatprep.subr.mxu0 0.0
    %555 = vmatpush1.msra.mxu0 %v504
    %556 = vmatprep.subr.mxu0 0.0
    %557 = vmatpush1.msra.mxu0 %v503
    %558 = vmatprep.subr.mxu0 0.0
    %559 = vmatpush2.msra.mxu0 0.0
    %560 = vmatprep.subr.mxu0 0.0
    %561 = vmatpush2.msra.mxu0 0.0
    %562 = vmatprep.subr.mxu0 0.0
    %563 = vmatpush2.msra.mxu0 0.0
    %564 = vmatprep.subr.mxu0 0.0
    %565 = vmatpush2.msra.mxu0 0.0
    %566 = vmatprep.subr.mxu0 0.0
    %567 = vmatpush2.msra.mxu0 0.0
    %568 = vmatprep.subr.mxu0 0.0
    %569 = vmatpush2.msra.mxu0 0.0
    %570 = vmatprep.subr.mxu0 0.0
    %571 = vmatpush2.msra.mxu0 0.0
    %572 = vmatprep.subr.mxu0 0.0
    %573 = vmatpush2.msra.mxu0 0.0
    %574 = vmatprep.subr.mxu0 0.0
    %575 = vmatpush2.msra.mxu0 0.0
    %576 = vmatprep.subr.mxu0 0.0
    %577 = vmatpush2.msra.mxu0 0.0
    %578 = vmatprep.subr.mxu0 0.0
    %579 = vmatpush2.msra.mxu0 0.0
    %580 = vmatprep.subr.mxu0 0.0
    %581 = vmatpush2.msra.mxu0 0.0
    %582 = vmatprep.subr.mxu0 0.0
    %583 = vmatpush2.msra.mxu0 0.0
    %584 = vmatprep.subr.mxu0 0.0
    %585 = vmatpush2.msra.mxu0 0.0
    %586 = vmatprep.subr.mxu0 0.0
    %587 = vmatpush2.msra.mxu0 0.0
    %588 = vmatprep.subr.mxu0 0.0
    %589 = vmatpush2.msra.mxu0 0.0
    %590 = vmatprep.mubr.f32.mxu0 0.0
    %591 = vmatmul.mubr.f32.gmra.mxu0 %v502
    %v592 = vpop.f32.mrf.mxu0
    %v593 = vadd.f32 %v524, %v592
    %v594 = vpop.f32.mrf.mxu0
    %595 = vdwg.mxu0
    %v596 = vmax.f32 %v593, 0.0
    %v597 = vld [vmem:[#allocation10] sm:$0xff]
    %v598 = vld [vmem:[#allocation10 + $0x8] sm:$0xff]
    %v599 = vld [vmem:[#allocation10 + $0x10] sm:$0xff]
    %v600 = vld [vmem:[#allocation10 + $0x18] sm:$0xff]
    %v601 = vld [vmem:[#allocation10 + $0x20] sm:$0xff]
    %v602 = vld [vmem:[#allocation10 + $0x28] sm:$0xff]
    %v603 = vld [vmem:[#allocation10 + $0x30] sm:$0xff]
    %v604 = vld [vmem:[#allocation10 + $0x38] sm:$0xff]
    %v605 = vld [vmem:[#allocation10 + $0x40] sm:$0xff]
    %v606 = vld [vmem:[#allocation10 + $0x48] sm:$0xff]
    %v607 = vld [vmem:[#allocation10 + $0x50] sm:$0xff]
    %v608 = vld [vmem:[#allocation10 + $0x58] sm:$0xff]
    %v609 = vld [vmem:[#allocation10 + $0x60] sm:$0xff]
    %v610 = vld [vmem:[#allocation10 + $0x68] sm:$0xff]
    %v611 = vld [vmem:[#allocation10 + $0x70] sm:$0xff]
    %v612 = vld [vmem:[#allocation10 + $0x78] sm:$0xff]
    %v613 = vld [vmem:[%s12] sm:$0x1]
    %v615 = vlaneseq
    %v616 = vshrl.u32 %v615, 7
    %v617 = vsub.s32 0, %v616
    %v618 = vrot.slane %v613, %v617
    %620 = vmatprep.subr.mxu0 0.0
    %621 = vmatpush1.msra.mxu0 %v612
    %622 = vmatprep.subr.mxu0 0.0
    %623 = vmatpush1.msra.mxu0 %v611
    %624 = vmatprep.subr.mxu0 0.0
    %625 = vmatpush1.msra.mxu0 %v610
    %626 = vmatprep.subr.mxu0 0.0
    %627 = vmatpush1.msra.mxu0 %v609
    %628 = vmatprep.subr.mxu0 0.0
    %629 = vmatpush1.msra.mxu0 %v608
    %630 = vmatprep.subr.mxu0 0.0
    %631 = vmatpush1.msra.mxu0 %v607
    %632 = vmatprep.subr.mxu0 0.0
    %633 = vmatpush1.msra.mxu0 %v606
    %634 = vmatprep.subr.mxu0 0.0
    %635 = vmatpush1.msra.mxu0 %v605
    %636 = vmatprep.subr.mxu0 0.0
    %637 = vmatpush1.msra.mxu0 %v604
    %638 = vmatprep.subr.mxu0 0.0
    %639 = vmatpush1.msra.mxu0 %v603
    %640 = vmatprep.subr.mxu0 0.0
    %641 = vmatpush1.msra.mxu0 %v602
    %642 = vmatprep.subr.mxu0 0.0
    %643 = vmatpush1.msra.mxu0 %v601
    %644 = vmatprep.subr.mxu0 0.0
    %645 = vmatpush1.msra.mxu0 %v600
    %646 = vmatprep.subr.mxu0 0.0
    %647 = vmatpush1.msra.mxu0 %v599
    %648 = vmatprep.subr.mxu0 0.0
    %649 = vmatpush1.msra.mxu0 %v598
    %650 = vmatprep.subr.mxu0 0.0
    %651 = vmatpush1.msra.mxu0 %v597
    %652 = vmatprep.subr.mxu0 0.0
    %653 = vmatpush2.msra.mxu0 0.0
    %654 = vmatprep.subr.mxu0 0.0
    %655 = vmatpush2.msra.mxu0 0.0
    %656 = vmatprep.subr.mxu0 0.0
    %657 = vmatpush2.msra.mxu0 0.0
    %658 = vmatprep.subr.mxu0 0.0
    %659 = vmatpush2.msra.mxu0 0.0
    %660 = vmatprep.subr.mxu0 0.0
    %661 = vmatpush2.msra.mxu0 0.0
    %662 = vmatprep.subr.mxu0 0.0
    %663 = vmatpush2.msra.mxu0 0.0
    %664 = vmatprep.subr.mxu0 0.0
    %665 = vmatpush2.msra.mxu0 0.0
    %666 = vmatprep.subr.mxu0 0.0
    %667 = vmatpush2.msra.mxu0 0.0
    %668 = vmatprep.subr.mxu0 0.0
    %669 = vmatpush2.msra.mxu0 0.0
    %670 = vmatprep.subr.mxu0 0.0
    %671 = vmatpush2.msra.mxu0 0.0
    %672 = vmatprep.subr.mxu0 0.0
    %673 = vmatpush2.msra.mxu0 0.0
    %674 = vmatprep.subr.mxu0 0.0
    %675 = vmatpush2.msra.mxu0 0.0
    %676 = vmatprep.subr.mxu0 0.0
    %677 = vmatpush2.msra.mxu0 0.0
    %678 = vmatprep.subr.mxu0 0.0
    %679 = vmatpush2.msra.mxu0 0.0
    %680 = vmatprep.subr.mxu0 0.0
    %681 = vmatpush2.msra.mxu0 0.0
    %682 = vmatprep.subr.mxu0 0.0
    %683 = vmatpush2.msra.mxu0 0.0
    %684 = vmatprep.mubr.f32.mxu0 0.0
    %685 = vmatmul.mubr.f32.gmra.mxu0 %v596
    %v686 = vpop.f32.mrf.mxu0
    %v687 = vadd.f32 %v618, %v686
    %v688 = vpop.f32.mrf.mxu0
    %689 = vdwg.mxu0
    %690 = vst [vmem:[%s13] sm:$0xff] %v687
    // Predicated region
    $region78: #{linear_network_forward.1} parent=1 // pred_check
      _
    $region79: #{linear_network_forward.1} parent=1 // pred_check_branch
      %692 = sbr.rel (0) target = $region81
    $region80: #{linear_network_forward.1} parent=1 // pred_region
      _
    $region81: #{linear_network_forward.1} parent=1 // pred_fallthru
      _
    // Predicated region
    $region82: #{linear_network_forward.1} parent=1 // pred_check
      _
    $region83: #{linear_network_forward.1} parent=1 // pred_check_branch
      %694 = sbr.rel (0) target = $region85
    $region84: #{linear_network_forward.1} parent=1 // pred_region
      _
    $region85: #{linear_network_forward.1} parent=1 // pred_fallthru
      _
    %695 = vsyncpa [#allocation3], 1
    %696 = vsyncpa [#allocation5], 1
    %697 = vsyncpa [#allocation8], 1
    %698 = vsyncpa [#allocation11], 1

</llo_original>
